<compile_context>
chip_gen: v7x
topology: tpu7x:2x2x1
jax: 0.10.0
libtpu: 0.0.40
codegen_flags: <defaults>
</compile_context>

<pallas_src>
import jax
import jax.numpy as jnp
from jax.experimental import pallas as pl
from jax.experimental.pallas import tpu as pltpu


# ----------------------------- Pallas kernels ------------------------------

def _rowsum_kernel(x_ref, o_ref):
    # x_ref: (TR, THW) tile of x1;  o_ref: (TR, 1) f32 accumulator.
    # The output block index is constant along the lane-tile grid axis, so the
    # accumulator stays resident in VMEM across the reduction sweep.
    @pl.when(pl.program_id(1) == 0)
    def _():
        o_ref[...] = jnp.zeros_like(o_ref)

    o_ref[...] += jnp.sum(
        x_ref[...].astype(jnp.float32), axis=-1, keepdims=True)


def _gate_kernel(g_ref, x_ref, o_ref):
    # g_ref: (TR, 1) f32 per-row gate;  x_ref / o_ref: (TR, THW) tiles.
    x = x_ref[...].astype(jnp.float32)
    o_ref[...] = (x * g_ref[...]).astype(o_ref.dtype)


# ------------------------------ Host wrapper -------------------------------

def _pick_tile(n, unit, cap):
    """Largest multiple of `unit` that divides n and is <= cap; fallback n."""
    best, t, found = n, unit, False
    while t <= min(n, cap):
        if n % t == 0:
            best, found = t, True
        t += unit
    return best if found else n


def eca_forward(x1, x2, weight):
    """ECA forward: x2 * sigmoid(conv1d(avgpool(x1))) broadcast over H, W."""
    B, C, H, W = x1.shape
    HW = H * W
    R = B * C
    k_size = int(weight.shape[0])

    x1r = x1.reshape(R, HW)
    x2r = x2.reshape(R, HW)

    # Lane-dense tiling: lanes in multiples of 128 (up to 2048), rows in
    # multiples of 8 (up to 256).  Fallback to the full dim when it does not
    # factor cleanly (allowed by the BlockSpec rules).
    thw = _pick_tile(HW, 128, 2048)
    tr = _pick_tile(R, 8, 256)
    grid_rows = pl.cdiv(R, tr)
    grid_cols = pl.cdiv(HW, thw)

    vmem_cap = 32 * 1024 * 1024  # safe on v5e/v6e/v7x; tiles are << this
    cparams_reduce = pltpu.CompilerParams(
        dimension_semantics=("parallel", "arbitrary"),
        vmem_limit_bytes=vmem_cap)
    cparams_gate = pltpu.CompilerParams(
        dimension_semantics=("parallel", "parallel"),
        vmem_limit_bytes=vmem_cap)

    # --- Phase 1: per-(b, c) spatial sums with f32 accumulation. ---
    sums = pl.pallas_call(
        _rowsum_kernel,
        out_shape=jax.ShapeDtypeStruct((R, 1), jnp.float32),
        grid=(grid_rows, grid_cols),
        in_specs=[pl.BlockSpec((tr, thw), lambda r, c: (r, c))],
        out_specs=pl.BlockSpec((tr, 1), lambda r, c: (r, 0)),
        compiler_params=cparams_reduce,
    )(x1r)

    # --- Tiny Conv1d(1,1,k, no bias) along channels + sigmoid: plain JAX. ---
    means = sums.reshape(B, C) / jnp.float32(HW)          # (B, C) f32
    pad = (k_size - 1) // 2
    mp = jnp.pad(means, ((0, 0), (pad, pad)))
    w = weight.astype(jnp.float32)
    y = sum(w[j] * mp[:, j:j + C] for j in range(k_size))  # (B, C)
    gate = jax.nn.sigmoid(y).reshape(R, 1)                 # (B*C, 1) f32

    # --- Phase 2: elementwise gating of x2 with lane-dense tiles. ---
    out = pl.pallas_call(
        _gate_kernel,
        out_shape=jax.ShapeDtypeStruct((R, HW), x2.dtype),
        grid=(grid_rows, grid_cols),
        in_specs=[
            pl.BlockSpec((tr, 1), lambda r, c: (r, 0)),    # per-row gate
            pl.BlockSpec((tr, thw), lambda r, c: (r, c)),  # x2 tile
        ],
        out_specs=pl.BlockSpec((tr, thw), lambda r, c: (r, c)),
        compiler_params=cparams_gate,
    )(gate, x2r)

    return out.reshape(B, C, H, W)


# ------------------------------- Reference ---------------------------------

def eca_reference(x1, x2, weight):
    """Pure-JAX reference of the PyTorch forward."""
    B, C, H, W = x1.shape
    k = weight.shape[0]
    pad = (k - 1) // 2
    m = jnp.mean(x1.astype(jnp.float32), axis=(2, 3))      # (B, C)
    mp = jnp.pad(m, ((0, 0), (pad, pad)))
    y = sum(weight[j].astype(jnp.float32) * mp[:, j:j + C] for j in range(k))
    gate = jax.nn.sigmoid(y)[:, :, None, None]
    return (x2 * gate).astype(x2.dtype)


if __name__ == "__main__":
    key = jax.random.PRNGKey(0)
    k_x1, k_x2, k_w = jax.random.split(key, 3)

    B, C, H, W = 2, 4, 16, 16
    k_size = 3

    x1 = jax.random.normal(k_x1, (B, C, H, W), dtype=jnp.float32)
    x2 = jax.random.normal(k_x2, (B, C, H, W), dtype=jnp.float32)
    # Conv1d(1, 1, 3, bias=False) weight, flattened from (1, 1, 3).
    weight = jax.random.uniform(
        k_w, (k_size,), dtype=jnp.float32, minval=-1.0, maxval=1.0)

    out = eca_forward(x1, x2, weight)
    out = jax.block_until_ready(out)

    ref = eca_reference(x1, x2, weight)
    assert out.shape == (B, C, H, W)
    assert jnp.allclose(out, ref, atol=1e-5, rtol=1e-5), "mismatch vs reference"

    print("KERNEL_OK")
</pallas_src>

<mosaic_0001>
module attributes {stable_mosaic.version = 11 : i64} {
  func.func @_rowsum_kernel(%arg0: i32, %arg1: i32, %arg2: memref<8x256xf32, #tpu.memory_space<vmem>>, %arg3: memref<8x1xf32, #tpu.memory_space<vmem>>) attributes {dimension_semantics = [#tpu.dimension_semantics<parallel>, #tpu.dimension_semantics<arbitrary>], iteration_bounds = array<i64: 1, 1>, scalar_prefetch = 0 : i64, scratch_operands = 0 : i64, tpu.core_type = #tpu.core_type<tc>, window_params = [{transform_indices = @transform_0, window_bounds = array<i64: 8, 256>}, {transform_indices = @transform_1, window_bounds = array<i64: 8, 1>}]} {
    %c0_i32 = arith.constant 0 : i32
    %0 = arith.cmpi eq, %arg1, %c0_i32 : i32
    %1 = arith.extui %0 : i1 to i32
    %c0_i32_0 = arith.constant 0 : i32
    %2 = arith.cmpi ne, %1, %c0_i32_0 : i32
    scf.if %2 {
      %cst_6 = arith.constant 0.000000e+00 : f32
      %9 = vector.broadcast %cst_6 : f32 to vector<8x1xf32>
      %c0_7 = arith.constant 0 : index
      %c0_8 = arith.constant 0 : index
      %10 = vector.load %arg3[%c0_7, %c0_8] : memref<8x1xf32, #tpu.memory_space<vmem>>, vector<8x1xf32>
      tpu.vector_store %arg3[%c0_7, %c0_8], %9 {strides = array<i32>} : memref<8x1xf32, #tpu.memory_space<vmem>>, vector<8x1xf32>,
    } else {
    }
    %c0 = arith.constant 0 : index
    %c0_1 = arith.constant 0 : index
    %3 = vector.load %arg3[%c0, %c0_1] : memref<8x1xf32, #tpu.memory_space<vmem>>, vector<8x1xf32>
    %c0_2 = arith.constant 0 : index
    %c0_3 = arith.constant 0 : index
    %4 = vector.load %arg2[%c0_2, %c0_3] : memref<8x256xf32, #tpu.memory_space<vmem>>, vector<8x256xf32>
    %cst = arith.constant dense<0.000000e+00> : vector<8xf32>
    %5 = vector.multi_reduction <add>, %4, %cst [1] : vector<8x256xf32> to vector<8xf32>
    %6 = vector.shape_cast %5 : vector<8xf32> to vector<8x1xf32>
    %7 = arith.addf %3, %6 : vector<8x1xf32>
    %c0_4 = arith.constant 0 : index
    %c0_5 = arith.constant 0 : index
    %8 = vector.load %arg3[%c0_4, %c0_5] : memref<8x1xf32, #tpu.memory_space<vmem>>, vector<8x1xf32>
    tpu.vector_store %arg3[%c0_4, %c0_5], %7 {strides = array<i32>} : memref<8x1xf32, #tpu.memory_space<vmem>>, vector<8x1xf32>,
    return
  }
  func.func @transform_0(%arg0: i32, %arg1: i32) -> (i32, i32) {
    %c0_i32 = arith.constant 0 : i32
    return %arg0, %arg1 : i32, i32
  }
  func.func @transform_1(%arg0: i32, %arg1: i32) -> (i32, i32) {
    %c0_i32 = arith.constant 0 : i32
    %c0_i32_0 = arith.constant 0 : i32
    return %arg0, %c0_i32 : i32, i32
  }
}

</mosaic_0001>

<llo_original>
// kernel: tpu_custom_call.1
$region0: #{tpu_custom_call.1}
  #allocation0 [shape = 'u32[]', space=smem, size = 0x4, offset = 0x4, fixed_abs, tag = 'smem constant byte address 0x4 - core index']
  #allocation1 [shape = 'u32[144,128]{1,0:T(1,128)}', space=vmem, size = 0x12000, scoped, tag = 'internal scratch']
  %s0 = inlined_call_operand.hbm [shape: f32[8,256], index: 0, kind: input, shape index: {}]
  %s1 = inlined_call_operand.vmem [shape: f32[8,1], index: 1, kind: output, shape index: {}]
  %s2 = sld [smem:[#allocation0]]
  $region22: #{tpu_custom_call.1} parent=0
    _
  %s4 = ssub.s32 1, %s2
  %s5 = scalar_select 0, %s4, %s2
  $region1: #{tpu_custom_call.1} parent=0
    #allocation2 [shape = 'u8[8192]{0}', space=vmem, size = 0x2000, scoped, tag = 'input window, operand 0, single buffered']
    #allocation3 [shape = 's32[1]{0}', space=sflag, size = 0x4, scoped, tag = 'scoped memory for tpu_custom_call.1']
    %6 = vsyncpa [#allocation3], 0
    // Predicated region
    $region2: #{tpu_custom_call.1} parent=1 // pred_check
      _
    $region3: #{tpu_custom_call.1} parent=1 // pred_check_branch
      %8 = sbr.rel (0) target = $region5
    $region4: #{tpu_custom_call.1} parent=1 // pred_region
      %s10 = ssub.s32 256, 256
      %11 = vsyncadd [#allocation3], %s10
      %s13 = sshll.u32 [#allocation2], 4
      %s14 = int_to_ptr.vmem [resolvable:$true] %s13
      %16 = dma.hbm_to_vmem [thread:$0]  %s0, 256, %s14, [#allocation3]
    $region5: #{tpu_custom_call.1} parent=1 // pred_fallthru
      _
    // Predicated region
    $region6: #{tpu_custom_call.1} parent=1 // pred_check
      _
    $region7: #{tpu_custom_call.1} parent=1 // pred_check_branch
      %18 = sbr.rel (0) target = $region9
    $region8: #{tpu_custom_call.1} parent=1 // pred_region
      %19 = dma.done [#allocation3], 256
    $region9: #{tpu_custom_call.1} parent=1 // pred_fallthru
      _
    %p20 = scmp.eq.s32.totalorder 0, 0
    // Predicated region
    $region10: #{tpu_custom_call.1} parent=1 // pred_check
      %p21 = pneg %p20
    $region11: #{tpu_custom_call.1} parent=1 // pred_check_branch
      %23 = sbr.rel (%p21) target = $region13
    $region12: #{tpu_custom_call.1} parent=1 // pred_region
      %vm24 = vcmask 7168
      %25 = vst.msk [vmem:[%s1] sm:$0xff] %vm24, 0.0
    $region13: #{tpu_custom_call.1} parent=1 // pred_fallthru
      _
    %v26 = vld [vmem:[%s1] sm:$0xff]
    %v27 = vld [vmem:[#allocation2] sm:$0xff]
    %v28 = vld [vmem:[#allocation2 + $0x8] sm:$0xff]
    %v29 = vadd.f32 %v27, %v28
    %30 = vadd.xlane.f32.xlu0 %v29
    %v31 = vpop.xlane.xlu0 %30
    %v32 = vadd.f32 %v26, %v31
    %vm33 = vcmask 7168
    %34 = vst.msk [vmem:[%s1] sm:$0xff] %vm33, %v32
    // Predicated region
    $region14: #{tpu_custom_call.1} parent=1 // pred_check
      _
    $region15: #{tpu_custom_call.1} parent=1 // pred_check_branch
      %36 = sbr.rel (0) target = $region17
    $region16: #{tpu_custom_call.1} parent=1 // pred_region
      _
    $region17: #{tpu_custom_call.1} parent=1 // pred_fallthru
      _
    // Predicated region
    $region18: #{tpu_custom_call.1} parent=1 // pred_check
      _
    $region19: #{tpu_custom_call.1} parent=1 // pred_check_branch
      %38 = sbr.rel (0) target = $region21
    $region20: #{tpu_custom_call.1} parent=1 // pred_region
      _
    $region21: #{tpu_custom_call.1} parent=1 // pred_fallthru
      _
    %39 = vsyncpa [#allocation3], 1

</llo_original>
